<compile_context>
chip_gen: v7x
topology: tpu7x:2x2x1
jax: 0.10.0
libtpu: 0.0.40
codegen_flags: <defaults>
</compile_context>

<pallas_src>
import functools

import jax
import jax.numpy as jnp
from jax.experimental import pallas as pl
from jax.experimental.pallas import tpu as pltpu


def _round_up(x, m):
    return ((x + m - 1) // m) * m


# ----------------------------------------------------------------------------
# Kernel 1: fused global-mean-pool (segment sum via one-hot matmul) + ReLU
#   grid = (cdiv(N, TN),)   -- single reduction axis over node tiles.
#   Accumulator (B, F) f32 lives in VMEM scratch; init at k==0, finalize at k==last.
# ----------------------------------------------------------------------------
def _pool_relu_kernel(batch_ref, x_ref, inv_ref, o_ref, acc_ref, *, n_nodes):
    k = pl.program_id(0)
    tn = x_ref.shape[0]
    b = acc_ref.shape[0]

    @pl.when(k == 0)
    def _init():
        acc_ref[...] = jnp.zeros_like(acc_ref)

    # Ragged-tail handling without padding x in HBM: zero invalid rows of x BEFORE the
    # matmul (NaN-safe: 0 * garbage never reaches the accumulator; a garbage batch id in
    # the tail can only select an all-zero row).
    row_idx = k * tn + jax.lax.broadcasted_iota(jnp.int32, (tn, 1), 0)       # (TN, 1)
    x_tile = jnp.where(row_idx < n_nodes, x_ref[...], 0)                      # (TN, F)

    batch_ids = batch_ref[...]                                                # (1, TN) int32
    gid = jax.lax.broadcasted_iota(jnp.int32, (b, tn), 0)                     # (B, TN)
    onehot = (gid == batch_ids).astype(x_ref.dtype)                           # (B, TN)

    # Segment sums come out of one MXU matmul; counts are NOT recomputed here
    # (precomputed 1/count arrives via inv_ref).
    acc_ref[...] += jnp.dot(onehot, x_tile, preferred_element_type=jnp.float32)

    @pl.when(k == pl.num_programs(0) - 1)
    def _finalize():
        # inv_ref is exact 1/max(count,1) computed in the wrapper (empty graphs -> 0,
        # matching scatter-mean's zero convention).
        o_ref[...] = jnp.maximum(acc_ref[...] * inv_ref[...], 0.0).astype(o_ref.dtype)


def _choose_node_tile(f, itemsize, target_bytes=512 * 1024):
    # ~512 KiB of x per grid step (amortizes the ~0.35 us per-step overhead),
    # multiple of 128 so the (1, TN) batch-id block stays lane-aligned.
    tn = (target_bytes // max(f * itemsize, 1)) // 128 * 128
    return int(min(max(tn, 256), 4096))


def global_mean_pool_relu(x, batch, num_graphs, *, node_tile=None):
    n, f = x.shape
    batch = batch.astype(jnp.int32)

    if node_tile is None:
        node_tile = _choose_node_tile(f, x.dtype.itemsize)
    else:
        node_tile = max(128, _round_up(int(node_tile), 128))

    # Single full block when the graph fits in one tile; otherwise multiple-of-128 tiles
    # with a masked ragged tail (no jnp.pad copy of x).
    tn = n if n <= node_tile else node_tile
    grid = (pl.cdiv(n, tn),)

    batch_2d = batch.reshape(1, n)

    # Per-graph inverse counts: trivial O(N) scatter-add in the wrapper (independent of the
    # feature tiling, so there is no point redoing it on the MXU every grid step).
    counts = jnp.zeros((num_graphs,), jnp.float32).at[batch].add(1.0)
    inv = (1.0 / jnp.maximum(counts, 1.0)).reshape(num_graphs, 1)

    kernel = functools.partial(_pool_relu_kernel, n_nodes=n)

    return pl.pallas_call(
        kernel,
        out_shape=jax.ShapeDtypeStruct((num_graphs, f), x.dtype),
        grid_spec=pltpu.PrefetchScalarGridSpec(
            num_scalar_prefetch=0,
            grid=grid,
            in_specs=[
                pl.BlockSpec((1, tn), lambda k: (0, k)),            # graph ids for this node tile
                pl.BlockSpec((tn, f), lambda k: (k, 0)),            # node-feature tile (full F width)
                pl.BlockSpec((num_graphs, 1), lambda k: (0, 0)),    # 1/count, resident
            ],
            out_specs=pl.BlockSpec((num_graphs, f), lambda k: (0, 0)),   # resident across reduction
            scratch_shapes=[pltpu.VMEM((num_graphs, f), jnp.float32)],   # running segment sums
        ),
        compiler_params=pltpu.CompilerParams(
            dimension_semantics=("arbitrary",),            # node axis is the reduction
            vmem_limit_bytes=32 * 1024 * 1024,             # explicit; safe on v5e/v6e/v7x
        ),
    )(batch_2d, x, inv)


# ----------------------------------------------------------------------------
# Kernel 2: tiled ReLU (already-batched path, after NCHW flatten)
#   No pad / no slice: block width = full row, grid over rows only.
#   (For a lone elementwise op XLA's fused jnp.maximum is equally good; kept as a
#    Pallas kernel to mirror the module's nn.ReLU explicitly.)
# ----------------------------------------------------------------------------
def _relu_kernel(x_ref, o_ref):
    o_ref[...] = jnp.maximum(x_ref[...], 0.0).astype(o_ref.dtype)


def relu_2d(x, *, row_tile=None):
    m, n = x.shape
    if row_tile is None:
        bytes_per_row = max(n * x.dtype.itemsize, 1)
        row_tile = max(8, min(1024, ((1 << 20) // bytes_per_row) // 8 * 8))  # ~1 MiB blocks
    else:
        row_tile = max(8, _round_up(int(row_tile), 8))

    tr = m if m <= row_tile else row_tile
    grid = (pl.cdiv(m, tr),)

    return pl.pallas_call(
        _relu_kernel,
        out_shape=jax.ShapeDtypeStruct((m, n), x.dtype),
        grid_spec=pltpu.PrefetchScalarGridSpec(
            num_scalar_prefetch=0,
            grid=grid,
            in_specs=[pl.BlockSpec((tr, n), lambda i: (i, 0))],
            out_specs=pl.BlockSpec((tr, n), lambda i: (i, 0)),
        ),
        compiler_params=pltpu.CompilerParams(
            dimension_semantics=("parallel",),
            vmem_limit_bytes=32 * 1024 * 1024,
        ),
    )(x)


# ----------------------------------------------------------------------------
# Module forward
# ----------------------------------------------------------------------------
def tox21_flatten_linear_forward(x, batch, batch_size):
    """Mirrors Tox21FlattenLinear.forward on value.x / value.data.batch."""
    if x.shape[0] != batch_size:
        # graph path: pool to [num_graphs, F], fused with ReLU
        return global_mean_pool_relu(x, batch, batch_size)
    # dense path: ReLU then (if 4-D NCHW) flatten; reshape commutes with ReLU.
    if x.ndim == 4:
        x = x.reshape(x.shape[0], -1)   # glue: contiguous row-major flatten (matches torch)
    return relu_2d(x)


if __name__ == "__main__":
    key = jax.random.PRNGKey(0)
    k1, k2, k3 = jax.random.split(key, 3)

    # --- graph (pooling) path: N nodes, F features, B graphs, N != B ---
    N, F, B = 200, 32, 8
    x_nodes = jax.random.normal(k1, (N, F), dtype=jnp.float32)
    batch = (jnp.arange(N, dtype=jnp.int32) * B) // N            # sorted graph ids, all nonempty

    out_pool = tox21_flatten_linear_forward(x_nodes, batch, batch_size=B)
    out_pool = jax.block_until_ready(out_pool)

    # reference check (pure JAX)
    seg_sum = jax.ops.segment_sum(x_nodes, batch, num_segments=B)
    seg_cnt = jax.ops.segment_sum(jnp.ones((N,), jnp.float32), batch, num_segments=B)
    ref_pool = jnp.maximum(seg_sum / jnp.maximum(seg_cnt, 1.0)[:, None], 0.0)
    assert out_pool.shape == (B, F)
    assert jnp.allclose(out_pool, ref_pool, atol=1e-5, rtol=1e-5)

    # also exercise the multi-tile reduction with a masked ragged tail (200 nodes, tile 128)
    out_pool_tiled = jax.block_until_ready(
        global_mean_pool_relu(x_nodes, batch, B, node_tile=128))
    assert jnp.allclose(out_pool_tiled, ref_pool, atol=1e-5, rtol=1e-5)

    # --- dense NCHW path: batch_dim_size == batch_size, 4-D input ---
    x_img = jax.random.normal(k2, (B, 4, 4, 2), dtype=jnp.float32)   # NCHW
    out_dense = tox21_flatten_linear_forward(x_img, batch=None, batch_size=B)
    out_dense = jax.block_until_ready(out_dense)
    ref_dense = jnp.maximum(x_img.reshape(B, -1), 0.0)
    assert out_dense.shape == (B, 4 * 4 * 2)
    assert jnp.allclose(out_dense, ref_dense)

    # --- dense 2-D path with ragged row tiling (partial output block) ---
    x2 = jax.random.normal(k3, (20, 48), dtype=jnp.float32)
    out2 = jax.block_until_ready(relu_2d(x2, row_tile=8))
    assert jnp.allclose(out2, jnp.maximum(x2, 0.0))

    # TODO(synk): self.linear (exnn.Linear) is instantiated but never called in the
    # reference forward, so no linear layer is applied here.
    print("KERNEL_OK")
</pallas_src>

<mosaic_0001>
module attributes {stable_mosaic.version = 11 : i64} {
  func.func @_pool_relu_kernel(%arg0: i32, %arg1: memref<1x200xi32, #tpu.memory_space<vmem>>, %arg2: memref<200x32xf32, #tpu.memory_space<vmem>>, %arg3: memref<8x1xf32, #tpu.memory_space<vmem>>, %arg4: memref<8x32xf32, #tpu.memory_space<vmem>>, %arg5: memref<8x32xf32, #tpu.memory_space<vmem>>) attributes {dimension_semantics = [#tpu.dimension_semantics<arbitrary>], iteration_bounds = array<i64: 1>, scalar_prefetch = 0 : i64, scratch_operands = 1 : i64, tpu.core_type = #tpu.core_type<tc>, window_params = [{transform_indices = @transform_0, window_bounds = array<i64: 1, 200>}, {transform_indices = @transform_1, window_bounds = array<i64: 200, 32>}, {pipeline_mode = #tpu.pipeline_mode<synchronous>, transform_indices = @transform_2, window_bounds = array<i64: 8, 1>}, {pipeline_mode = #tpu.pipeline_mode<synchronous>, transform_indices = @transform_3, window_bounds = array<i64: 8, 32>}]} {
    %c0_i32 = arith.constant 0 : i32
    %0 = arith.cmpi eq, %arg0, %c0_i32 : i32
    %1 = arith.extui %0 : i1 to i32
    %c0_i32_0 = arith.constant 0 : i32
    %2 = arith.cmpi ne, %1, %c0_i32_0 : i32
    scf.if %2 {
      %cst_12 = arith.constant 0.000000e+00 : f32
      %28 = vector.broadcast %cst_12 : f32 to vector<8x32xf32>
      %c0_13 = arith.constant 0 : index
      %c0_14 = arith.constant 0 : index
      %29 = vector.load %arg5[%c0_13, %c0_14] : memref<8x32xf32, #tpu.memory_space<vmem>>, vector<8x32xf32>
      tpu.vector_store %arg5[%c0_13, %c0_14], %28 {strides = array<i32>} : memref<8x32xf32, #tpu.memory_space<vmem>>, vector<8x32xf32>,
    } else {
    }
    %c200_i32 = arith.constant 200 : i32
    %3 = arith.muli %arg0, %c200_i32 : i32
    %4 = tpu.iota {dimensions = array<i32: 0>} : vector<200x1xi32>
    %5 = vector.broadcast %3 : i32 to vector<200x1xi32>
    %6 = arith.addi %5, %4 : vector<200x1xi32>
    %c200_i32_1 = arith.constant 200 : i32
    %7 = vector.broadcast %c200_i32_1 : i32 to vector<200x1xi32>
    %8 = arith.cmpi slt, %6, %7 : vector<200x1xi32>
    %c0 = arith.constant 0 : index
    %c0_2 = arith.constant 0 : index
    %9 = vector.load %arg2[%c0, %c0_2] : memref<200x32xf32, #tpu.memory_space<vmem>>, vector<200x32xf32>
    %c0_i32_3 = arith.constant 0 : i32
    %10 = arith.sitofp %c0_i32_3 : i32 to f32
    %11 = vector.shape_cast %8 : vector<200x1xi1> to vector<200x1xi1>
    %12 = vector.broadcast %11 : vector<200x1xi1> to vector<200x32xi1>
    %13 = vector.broadcast %10 : f32 to vector<200x32xf32>
    %14 = arith.select %12, %9, %13 : vector<200x32xi1>, vector<200x32xf32>
    %c0_4 = arith.constant 0 : index
    %c0_5 = arith.constant 0 : index
    %15 = vector.load %arg1[%c0_4, %c0_5] : memref<1x200xi32, #tpu.memory_space<vmem>>, vector<1x200xi32>
    %16 = tpu.iota {dimensions = array<i32: 0>} : vector<8x200xi32>
    %17 = vector.broadcast %15 : vector<1x200xi32> to vector<8x200xi32>
    %18 = arith.cmpi eq, %16, %17 : vector<8x200xi32>
    %19 = arith.extui %18 : vector<8x200xi1> to vector<8x200xi32>
    %20 = arith.sitofp %19 : vector<8x200xi32> to vector<8x200xf32>
    %c0_6 = arith.constant 0 : index
    %c0_7 = arith.constant 0 : index
    %21 = vector.load %arg5[%c0_6, %c0_7] : memref<8x32xf32, #tpu.memory_space<vmem>>, vector<8x32xf32>
    %cst = arith.constant dense<0.000000e+00> : vector<8x32xf32>
    %22 = tpu.matmul %20, %14, %cst {dimension_numbers = #tpu.dot_dimension_numbers<[1], [0], [0], [1], [0, 0, 1, 1], [], []>} : vector<8x200xf32>, vector<200x32xf32>, vector<8x32xf32> -> vector<8x32xf32>
    %23 = arith.addf %21, %22 : vector<8x32xf32>
    %c0_8 = arith.constant 0 : index
    %c0_9 = arith.constant 0 : index
    %24 = vector.load %arg5[%c0_8, %c0_9] : memref<8x32xf32, #tpu.memory_space<vmem>>, vector<8x32xf32>
    tpu.vector_store %arg5[%c0_8, %c0_9], %23 {strides = array<i32>} : memref<8x32xf32, #tpu.memory_space<vmem>>, vector<8x32xf32>,
    %c0_i32_10 = arith.constant 0 : i32
    %25 = arith.cmpi eq, %arg0, %c0_i32_10 : i32
    %26 = arith.extui %25 : i1 to i32
    %c0_i32_11 = arith.constant 0 : i32
    %27 = arith.cmpi ne, %26, %c0_i32_11 : i32
    scf.if %27 {
      %c0_12 = arith.constant 0 : index
      %c0_13 = arith.constant 0 : index
      %28 = vector.load %arg5[%c0_12, %c0_13] : memref<8x32xf32, #tpu.memory_space<vmem>>, vector<8x32xf32>
      %c0_14 = arith.constant 0 : index
      %c0_15 = arith.constant 0 : index
      %29 = vector.load %arg3[%c0_14, %c0_15] : memref<8x1xf32, #tpu.memory_space<vmem>>, vector<8x1xf32>
      %30 = vector.broadcast %29 : vector<8x1xf32> to vector<8x32xf32>
      %31 = arith.mulf %28, %30 : vector<8x32xf32>
      %cst_16 = arith.constant 0.000000e+00 : f32
      %32 = vector.broadcast %cst_16 : f32 to vector<8x32xf32>
      %33 = arith.maximumf %31, %32 : vector<8x32xf32>
      %c0_17 = arith.constant 0 : index
      %c0_18 = arith.constant 0 : index
      %34 = vector.load %arg4[%c0_17, %c0_18] : memref<8x32xf32, #tpu.memory_space<vmem>>, vector<8x32xf32>
      tpu.vector_store %arg4[%c0_17, %c0_18], %33 {strides = array<i32>} : memref<8x32xf32, #tpu.memory_space<vmem>>, vector<8x32xf32>,
    } else {
    }
    return
  }
  func.func @transform_0(%arg0: i32) -> (i32, i32) {
    %c0_i32 = arith.constant 0 : i32
    %c0_i32_0 = arith.constant 0 : i32
    return %c0_i32, %arg0 : i32, i32
  }
  func.func @transform_1(%arg0: i32) -> (i32, i32) {
    %c0_i32 = arith.constant 0 : i32
    %c0_i32_0 = arith.constant 0 : i32
    return %arg0, %c0_i32 : i32, i32
  }
  func.func @transform_2(%arg0: i32) -> (i32, i32) {
    %c0_i32 = arith.constant 0 : i32
    %c0_i32_0 = arith.constant 0 : i32
    %c0_i32_1 = arith.constant 0 : i32
    return %c0_i32, %c0_i32_0 : i32, i32
  }
  func.func @transform_3(%arg0: i32) -> (i32, i32) {
    %c0_i32 = arith.constant 0 : i32
    %c0_i32_0 = arith.constant 0 : i32
    %c0_i32_1 = arith.constant 0 : i32
    return %c0_i32, %c0_i32_0 : i32, i32
  }
}

</mosaic_0001>

<llo_original>
// kernel: tpu_custom_call.1
$region0: #{tpu_custom_call.1}
  #allocation0 [shape = 'u32[]', space=smem, size = 0x4, offset = 0x4, fixed_abs, tag = 'smem constant byte address 0x4 - core index']
  #allocation1 [shape = 'u32[144,128]{1,0:T(1,128)}', space=vmem, size = 0x12000, scoped, tag = 'internal scratch']
  #allocation2 [shape = 'f32[8,32]{1,0:T(8,128)}', space=vmem, size = 0x1000, scoped, tag = 'scratch operand']
  %s0 = inlined_call_operand.vmem [shape: s32[1,200], index: 0, kind: input, shape index: {}]
  %s1 = inlined_call_operand.vmem [shape: f32[200,32], index: 1, kind: input, shape index: {}]
  %s2 = inlined_call_operand.vmem [shape: f32[8,1], index: 2, kind: input, shape index: {}]
  %s3 = inlined_call_operand.hbm [shape: f32[8,32], index: 3, kind: output, shape index: {}]
  %s4 = sld [smem:[#allocation0]]
  $region30: #{tpu_custom_call.1} parent=0
    _
  %s6 = ssub.s32 1, %s4
  %s7 = scalar_select 0, %s6, %s4
  $region1: #{tpu_custom_call.1} parent=0
    #allocation3 [shape = 'u8[4096]{0}', space=vmem, size = 0x1000, scoped, tag = 'output window, operand 0, single buffered']
    #allocation4 [shape = 's32[1]{0}', space=sflag, size = 0x4, scoped, tag = 'scoped memory for tpu_custom_call.1']
    %8 = vsyncpa [#allocation4], 0
    // Predicated region
    $region2: #{tpu_custom_call.1} parent=1 // pred_check
      _
    $region3: #{tpu_custom_call.1} parent=1 // pred_check_branch
      %10 = sbr.rel (0) target = $region5
    $region4: #{tpu_custom_call.1} parent=1 // pred_region
      _
    $region5: #{tpu_custom_call.1} parent=1 // pred_fallthru
      _
    // Predicated region
    $region6: #{tpu_custom_call.1} parent=1 // pred_check
      _
    $region7: #{tpu_custom_call.1} parent=1 // pred_check_branch
      %12 = sbr.rel (0) target = $region9
    $region8: #{tpu_custom_call.1} parent=1 // pred_region
      _
    $region9: #{tpu_custom_call.1} parent=1 // pred_fallthru
      _
    // Predicated region
    $region10: #{tpu_custom_call.1} parent=1 // pred_check
      _
    $region11: #{tpu_custom_call.1} parent=1 // pred_check_branch
      %14 = sbr.rel (0) target = $region13
    $region12: #{tpu_custom_call.1} parent=1 // pred_region
      _
    $region13: #{tpu_custom_call.1} parent=1 // pred_fallthru
      _
    %p15 = scmp.eq.s32.totalorder 0, 0
    // Predicated region
    $region14: #{tpu_custom_call.1} parent=1 // pred_check
      %p16 = pneg %p15
    $region15: #{tpu_custom_call.1} parent=1 // pred_check_branch
      %18 = sbr.rel (%p16) target = $region17
    $region16: #{tpu_custom_call.1} parent=1 // pred_region
      %vm19 = vcmask 261120
      %20 = vst.msk [vmem:[#allocation2] sm:$0xff] %vm19, 0.0
    $region17: #{tpu_custom_call.1} parent=1 // pred_fallthru
      _
    %s21 = smul.u32 0, 200
    %v22 = vlaneseq
    %v23 = vshrl.u32 %v22, 7
    %v24 = vadd.s32 %v23, 8
    %v25 = vadd.s32 %v23, 16
    %v26 = vadd.s32 %v23, 24
    %v27 = vadd.s32 %v23, 32
    %v28 = vadd.s32 %v23, 40
    %v29 = vadd.s32 %v23, 48
    %v30 = vadd.s32 %v23, 56
    %v31 = vadd.s32 %v23, 64
    %v32 = vadd.s32 %v23, 72
    %v33 = vadd.s32 %v23, 80
    %v34 = vadd.s32 %v23, 88
    %v35 = vadd.s32 %v23, 96
    %v36 = vadd.s32 %v23, 104
    %v37 = vadd.s32 %v23, 112
    %v38 = vadd.s32 %v23, 120
    %v39 = vadd.s32 %v23, 128
    %v40 = vadd.s32 %v23, 136
    %v41 = vadd.s32 %v23, 144
    %v42 = vadd.s32 %v23, 152
    %v43 = vadd.s32 %v23, 160
    %v44 = vadd.s32 %v23, 168
    %v45 = vadd.s32 %v23, 176
    %v46 = vadd.s32 %v23, 184
    %v47 = vadd.s32 %v23, 192
    %v48 = vstv %s21
    %v49 = vadd.s32 %v48, %v23
    %v50 = vadd.s32 %v48, %v24
    %v51 = vadd.s32 %v48, %v25
    %v52 = vadd.s32 %v48, %v26
    %v53 = vadd.s32 %v48, %v27
    %v54 = vadd.s32 %v48, %v28
    %v55 = vadd.s32 %v48, %v29
    %v56 = vadd.s32 %v48, %v30
    %v57 = vadd.s32 %v48, %v31
    %v58 = vadd.s32 %v48, %v32
    %v59 = vadd.s32 %v48, %v33
    %v60 = vadd.s32 %v48, %v34
    %v61 = vadd.s32 %v48, %v35
    %v62 = vadd.s32 %v48, %v36
    %v63 = vadd.s32 %v48, %v37
    %v64 = vadd.s32 %v48, %v38
    %v65 = vadd.s32 %v48, %v39
    %v66 = vadd.s32 %v48, %v40
    %v67 = vadd.s32 %v48, %v41
    %v68 = vadd.s32 %v48, %v42
    %v69 = vadd.s32 %v48, %v43
    %v70 = vadd.s32 %v48, %v44
    %v71 = vadd.s32 %v48, %v45
    %v72 = vadd.s32 %v48, %v46
    %v73 = vadd.s32 %v48, %v47
    %vm74 = vcmp.lt.s32.totalorder %v49, 200
    %vm75 = vcmp.lt.s32.totalorder %v50, 200
    %vm76 = vcmp.lt.s32.totalorder %v51, 200
    %vm77 = vcmp.lt.s32.totalorder %v52, 200
    %vm78 = vcmp.lt.s32.totalorder %v53, 200
    %vm79 = vcmp.lt.s32.totalorder %v54, 200
    %vm80 = vcmp.lt.s32.totalorder %v55, 200
    %vm81 = vcmp.lt.s32.totalorder %v56, 200
    %vm82 = vcmp.lt.s32.totalorder %v57, 200
    %vm83 = vcmp.lt.s32.totalorder %v58, 200
    %vm84 = vcmp.lt.s32.totalorder %v59, 200
    %vm85 = vcmp.lt.s32.totalorder %v60, 200
    %vm86 = vcmp.lt.s32.totalorder %v61, 200
    %vm87 = vcmp.lt.s32.totalorder %v62, 200
    %vm88 = vcmp.lt.s32.totalorder %v63, 200
    %vm89 = vcmp.lt.s32.totalorder %v64, 200
    %vm90 = vcmp.lt.s32.totalorder %v65, 200
    %vm91 = vcmp.lt.s32.totalorder %v66, 200
    %vm92 = vcmp.lt.s32.totalorder %v67, 200
    %vm93 = vcmp.lt.s32.totalorder %v68, 200
    %vm94 = vcmp.lt.s32.totalorder %v69, 200
    %vm95 = vcmp.lt.s32.totalorder %v70, 200
    %vm96 = vcmp.lt.s32.totalorder %v71, 200
    %vm97 = vcmp.lt.s32.totalorder %v72, 200
    %vm98 = vcmp.lt.s32.totalorder %v73, 200
    %v99 = vld [vmem:[%s1] sm:$0xff]
    %v100 = vld [vmem:[%s1 + $0x8] sm:$0xff]
    %v101 = vld [vmem:[%s1 + $0x10] sm:$0xff]
    %v102 = vld [vmem:[%s1 + $0x18] sm:$0xff]
    %v103 = vld [vmem:[%s1 + $0x20] sm:$0xff]
    %v104 = vld [vmem:[%s1 + $0x28] sm:$0xff]
    %v105 = vld [vmem:[%s1 + $0x30] sm:$0xff]
    %v106 = vld [vmem:[%s1 + $0x38] sm:$0xff]
    %v107 = vld [vmem:[%s1 + $0x40] sm:$0xff]
    %v108 = vld [vmem:[%s1 + $0x48] sm:$0xff]
    %v109 = vld [vmem:[%s1 + $0x50] sm:$0xff]
    %v110 = vld [vmem:[%s1 + $0x58] sm:$0xff]
    %v111 = vld [vmem:[%s1 + $0x60] sm:$0xff]
    %v112 = vld [vmem:[%s1 + $0x68] sm:$0xff]
    %v113 = vld [vmem:[%s1 + $0x70] sm:$0xff]
    %v114 = vld [vmem:[%s1 + $0x78] sm:$0xff]
    %v115 = vld [vmem:[%s1 + $0x80] sm:$0xff]
    %v116 = vld [vmem:[%s1 + $0x88] sm:$0xff]
    %v117 = vld [vmem:[%s1 + $0x90] sm:$0xff]
    %v118 = vld [vmem:[%s1 + $0x98] sm:$0xff]
    %v119 = vld [vmem:[%s1 + $0xa0] sm:$0xff]
    %v120 = vld [vmem:[%s1 + $0xa8] sm:$0xff]
    %v121 = vld [vmem:[%s1 + $0xb0] sm:$0xff]
    %v122 = vld [vmem:[%s1 + $0xb8] sm:$0xff]
    %v123 = vld [vmem:[%s1 + $0xc0] sm:$0xff]
    %v124 = vsel %vm74, 1, 0
    %v125 = vsel %vm75, 1, 0
    %v126 = vsel %vm76, 1, 0
    %v127 = vsel %vm77, 1, 0
    %v128 = vsel %vm78, 1, 0
    %v129 = vsel %vm79, 1, 0
    %v130 = vsel %vm80, 1, 0
    %v131 = vsel %vm81, 1, 0
    %v132 = vsel %vm82, 1, 0
    %v133 = vsel %vm83, 1, 0
    %v134 = vsel %vm84, 1, 0
    %v135 = vsel %vm85, 1, 0
    %v136 = vsel %vm86, 1, 0
    %v137 = vsel %vm87, 1, 0
    %v138 = vsel %vm88, 1, 0
    %v139 = vsel %vm89, 1, 0
    %v140 = vsel %vm90, 1, 0
    %v141 = vsel %vm91, 1, 0
    %v142 = vsel %vm92, 1, 0
    %v143 = vsel %vm93, 1, 0
    %v144 = vsel %vm94, 1, 0
    %v145 = vsel %vm95, 1, 0
    %v146 = vsel %vm96, 1, 0
    %v147 = vsel %vm97, 1, 0
    %v148 = vsel %vm98, 1, 0
    %vm149 = vcmp.eq.s32.totalorder %v124, 1
    %vm150 = vcmp.eq.s32.totalorder %v125, 1
    %vm151 = vcmp.eq.s32.totalorder %v126, 1
    %vm152 = vcmp.eq.s32.totalorder %v127, 1
    %vm153 = vcmp.eq.s32.totalorder %v128, 1
    %vm154 = vcmp.eq.s32.totalorder %v129, 1
    %vm155 = vcmp.eq.s32.totalorder %v130, 1
    %vm156 = vcmp.eq.s32.totalorder %v131, 1
    %vm157 = vcmp.eq.s32.totalorder %v132, 1
    %vm158 = vcmp.eq.s32.totalorder %v133, 1
    %vm159 = vcmp.eq.s32.totalorder %v134, 1
    %vm160 = vcmp.eq.s32.totalorder %v135, 1
    %vm161 = vcmp.eq.s32.totalorder %v136, 1
    %vm162 = vcmp.eq.s32.totalorder %v137, 1
    %vm163 = vcmp.eq.s32.totalorder %v138, 1
    %vm164 = vcmp.eq.s32.totalorder %v139, 1
    %vm165 = vcmp.eq.s32.totalorder %v140, 1
    %vm166 = vcmp.eq.s32.totalorder %v141, 1
    %vm167 = vcmp.eq.s32.totalorder %v142, 1
    %vm168 = vcmp.eq.s32.totalorder %v143, 1
    %vm169 = vcmp.eq.s32.totalorder %v144, 1
    %vm170 = vcmp.eq.s32.totalorder %v145, 1
    %vm171 = vcmp.eq.s32.totalorder %v146, 1
    %vm172 = vcmp.eq.s32.totalorder %v147, 1
    %vm173 = vcmp.eq.s32.totalorder %v148, 1
    %v174 = vsel %vm149, %v99, 0.0
    %v175 = vsel %vm150, %v100, 0.0
    %v176 = vsel %vm151, %v101, 0.0
    %v177 = vsel %vm152, %v102, 0.0
    %v178 = vsel %vm153, %v103, 0.0
    %v179 = vsel %vm154, %v104, 0.0
    %v180 = vsel %vm155, %v105, 0.0
    %v181 = vsel %vm156, %v106, 0.0
    %v182 = vsel %vm157, %v107, 0.0
    %v183 = vsel %vm158, %v108, 0.0
    %v184 = vsel %vm159, %v109, 0.0
    %v185 = vsel %vm160, %v110, 0.0
    %v186 = vsel %vm161, %v111, 0.0
    %v187 = vsel %vm162, %v112, 0.0
    %v188 = vsel %vm163, %v113, 0.0
    %v189 = vsel %vm164, %v114, 0.0
    %v190 = vsel %vm165, %v115, 0.0
    %v191 = vsel %vm166, %v116, 0.0
    %v192 = vsel %vm167, %v117, 0.0
    %v193 = vsel %vm168, %v118, 0.0
    %v194 = vsel %vm169, %v119, 0.0
    %v195 = vsel %vm170, %v120, 0.0
    %v196 = vsel %vm171, %v121, 0.0
    %v197 = vsel %vm172, %v122, 0.0
    %v198 = vsel %vm173, %v123, 0.0
    %v199 = vld [vmem:[%s0] sm:$0x3]
    %v200 = vlaneseq
    %v201 = vshrl.u32 %v200, 7
    %v202 = vsub.s32 0, %v201
    %v203 = vrot.slane %v199, %v202
    %v204 = vlaneseq
    %v205 = vshrl.u32 %v204, 7
    %v206 = vsub.s32 1, %v205
    %v207 = vrot.slane %v199, %v206
    %vm208 = vcmp.eq.s32.totalorder %v23, %v203
    %vm209 = vcmp.eq.s32.totalorder %v23, %v207
    %v210 = vsel %vm208, 1, 0
    %v211 = vsel %vm209, 1, 0
    %v212 = vcvt.s32.f32 %v210
    %v213 = vcvt.s32.f32 %v211
    %v214 = vld [vmem:[#allocation2] sm:$0xff]
    %vm215 = vcmask 588800
    %v217 = vsel %vm215, %v213, 0
    %219 = vmatprep.subr.mxu0 0.0
    %220 = vmatpush1.msra.mxu0 %v174
    %221 = vmatprep.subr.mxu0 0.0
    %222 = vmatpush1.msra.mxu0 %v175
    %223 = vmatprep.subr.mxu0 0.0
    %224 = vmatpush1.msra.mxu0 %v176
    %225 = vmatprep.subr.mxu0 0.0
    %226 = vmatpush1.msra.mxu0 %v177
    %227 = vmatprep.subr.mxu0 0.0
    %228 = vmatpush1.msra.mxu0 %v178
    %229 = vmatprep.subr.mxu0 0.0
    %230 = vmatpush1.msra.mxu0 %v179
    %231 = vmatprep.subr.mxu0 0.0
    %232 = vmatpush1.msra.mxu0 %v180
    %233 = vmatprep.subr.mxu0 0.0
    %234 = vmatpush1.msra.mxu0 %v181
    %235 = vmatprep.subr.mxu0 0.0
    %236 = vmatpush1.msra.mxu0 %v182
    %237 = vmatprep.subr.mxu0 0.0
    %238 = vmatpush1.msra.mxu0 %v183
    %239 = vmatprep.subr.mxu0 0.0
    %240 = vmatpush1.msra.mxu0 %v184
    %241 = vmatprep.subr.mxu0 0.0
    %242 = vmatpush1.msra.mxu0 %v185
    %243 = vmatprep.subr.mxu0 0.0
    %244 = vmatpush1.msra.mxu0 %v186
    %245 = vmatprep.subr.mxu0 0.0
    %246 = vmatpush1.msra.mxu0 %v187
    %247 = vmatprep.subr.mxu0 0.0
    %248 = vmatpush1.msra.mxu0 %v188
    %249 = vmatprep.subr.mxu0 0.0
    %250 = vmatpush1.msra.mxu0 %v189
    %251 = vmatprep.subr.mxu0 0.0
    %252 = vmatpush1.msra.mxu0 %v190
    %253 = vmatprep.subr.mxu0 0.0
    %254 = vmatpush1.msra.mxu0 %v191
    %255 = vmatprep.subr.mxu0 0.0
    %256 = vmatpush1.msra.mxu0 %v192
    %257 = vmatprep.subr.mxu0 0.0
    %258 = vmatpush1.msra.mxu0 %v193
    %259 = vmatprep.subr.mxu0 0.0
    %260 = vmatpush1.msra.mxu0 %v194
    %261 = vmatprep.subr.mxu0 0.0
    %262 = vmatpush1.msra.mxu0 %v195
    %263 = vmatprep.subr.mxu0 0.0
    %264 = vmatpush1.msra.mxu0 %v196
    %265 = vmatprep.subr.mxu0 0.0
    %266 = vmatpush1.msra.mxu0 %v197
    %267 = vmatprep.subr.mxu0 0.0
    %268 = vmatpush1.msra.mxu0 %v198
    %269 = vmatprep.subr.mxu0 0.0
    %270 = vmatpush1.msra.mxu0 0.0
    %271 = vmatprep.subr.mxu0 0.0
    %272 = vmatpush1.msra.mxu0 0.0
    %273 = vmatprep.subr.mxu0 0.0
    %274 = vmatpush1.msra.mxu0 0.0
    %275 = vmatprep.subr.mxu0 0.0
    %276 = vmatpush1.msra.mxu0 0.0
    %277 = vmatprep.subr.mxu0 0.0
    %278 = vmatpush1.msra.mxu0 0.0
    %279 = vmatprep.subr.mxu0 0.0
    %280 = vmatpush1.msra.mxu0 0.0
    %281 = vmatprep.subr.mxu0 0.0
    %282 = vmatpush1.msra.mxu0 0.0
    %283 = vmatprep.mubr.f32.mxu0 %v217
    %284 = vmatmul.mubr.f32.gmra.mrb[0].mxu0 %v212
    %v285 = vpop.f32.mrb[0].mxu0
    %v286 = vadd.f32 0.0, %v285
    %v287 = vpop.f32.mrb[0].mxu0
    %288 = vdwg.mxu0
    %v289 = vadd.f32 %v214, %v286
    %vm290 = vcmask 261120
    %291 = vst.msk [vmem:[#allocation2] sm:$0xff] %vm290, %v289
    // Predicated region
    $region18: #{tpu_custom_call.1} parent=1 // pred_check
      %p292 = pneg %p15
    $region19: #{tpu_custom_call.1} parent=1 // pred_check_branch
      %294 = sbr.rel (%p292) target = $region21
    $region20: #{tpu_custom_call.1} parent=1 // pred_region
      %v295 = vld [vmem:[#allocation2] sm:$0xff]
      %v296 = vld [vmem:[%s2] sm:$0xff]
      %298 = vset.pattern.permute.xlu0 0
      %299 = vperm.xlu0 %298, %v296
      %v300 = vpop.permute.xlu0 %299
      %v302 = vmul.f32 %v295, %v300
      %v303 = vmax.f32 %v302, 0.0
      %304 = vst.msk [vmem:[#allocation3] sm:$0xff] %vm290, %v303
    $region21: #{tpu_custom_call.1} parent=1 // pred_fallthru
      _
    // Predicated region
    $region22: #{tpu_custom_call.1} parent=1 // pred_check
      _
    $region23: #{tpu_custom_call.1} parent=1 // pred_check_branch
      %306 = sbr.rel (0) target = $region25
    $region24: #{tpu_custom_call.1} parent=1 // pred_region
      %s308 = ssub.s32 128, 128
      %309 = vsyncadd [#allocation4], %s308
      %s311 = sshll.u32 [#allocation3], 4
      %s312 = int_to_ptr.vmem [resolvable:$true] %s311
      %314 = dma.vmem_to_hbm [thread:$0]  %s312, 128, %s3, [#allocation4]
    $region25: #{tpu_custom_call.1} parent=1 // pred_fallthru
      _
    // Predicated region
    $region26: #{tpu_custom_call.1} parent=1 // pred_check
      _
    $region27: #{tpu_custom_call.1} parent=1 // pred_check_branch
      %316 = sbr.rel (0) target = $region29
    $region28: #{tpu_custom_call.1} parent=1 // pred_region
      %317 = dma.done [#allocation4], 128
    $region29: #{tpu_custom_call.1} parent=1 // pred_fallthru
      _
    %318 = vsyncpa [#allocation4], 1

</llo_original>
